<compile_context>
chip_gen: v7x
topology: tpu7x:2x2x1
jax: 0.10.0
libtpu: 0.0.40
codegen_flags: <defaults>
</compile_context>

<pallas_src>
import jax
import jax.numpy as jnp
from jax.experimental import pallas as pl
from jax.experimental.pallas import tpu as pltpu

SUBLANE = 8  # TPU sublane count (second-to-last dim granularity)


def _round_up(x, m):
    return ((x + m - 1) // m) * m


def _linear_kernel(x_ref, w_ref, b_ref, o_ref):
    """y = x @ W + b for one (TB, IN) batch tile; IN == OUT == 5.

    Pure VPU: (TB,1) lane-broadcast * (1,OUT) sublane-broadcast FMAs, unrolled
    over the 5 input features. No lane padding ever materializes, in HBM or VMEM.
    """
    x = x_ref[...]            # (TB, IN)  float32
    w = w_ref[...]            # (IN, OUT) float32, VMEM-resident across the grid
    b = b_ref[...]            # (1, OUT)  float32, VMEM-resident across the grid

    in_features = x.shape[1]  # static (5) -> loop unrolls at trace time
    acc = x[:, 0:1] * w[0:1, :]
    for k in range(1, in_features):
        acc = acc + x[:, k:k + 1] * w[k:k + 1, :]
    o_ref[...] = (acc + b).astype(o_ref.dtype)


@jax.jit
def linear_pallas(x_2d, w, b_row):
    """x_2d: (B, IN) f32; w: (IN, OUT) f32; b_row: (1, OUT) f32 -> (B, OUT) f32."""
    B, IN = x_2d.shape
    OUT = w.shape[1]

    # ---- Batch-tile selection (static under jit) ----------------------------
    B8 = _round_up(max(B, 1), SUBLANE)
    if B8 <= 1024:
        # Small batch (the torch script path is B == 1): one un-tiled block,
        # grid=(1,), no per-step pipeline overhead.
        TB = B8
    else:
        # Large batch: big tiles so the pipeline is HBM-bound rather than
        # per-step-overhead bound; keep >= 2 grid steps so the "parallel" axis
        # can shard across both TensorCores on v7x.
        TB = 2048
        while TB > 1024 and pl.cdiv(B8, TB) < 2:
            TB //= 2
    B_pad = _round_up(B8, TB)

    # Only the batch rows are padded (20 B/row of real data); the feature dim
    # stays at its true width so no lane padding ever hits HBM.
    if B_pad != B:
        x_in = jnp.zeros((B_pad, IN), x_2d.dtype).at[:B, :].set(x_2d)
    else:
        x_in = x_2d

    grid = (B_pad // TB,)
    out = pl.pallas_call(
        _linear_kernel,
        out_shape=jax.ShapeDtypeStruct((B_pad, OUT), x_2d.dtype),
        grid=grid,
        in_specs=[
            # x: (TB, 5) blocks; last dim == full array extent -> legal block.
            pl.BlockSpec((TB, IN), lambda i: (i, 0)),
            # Weight / bias: same block index every step -> stay VMEM-resident.
            pl.BlockSpec((IN, OUT), lambda i: (0, 0)),
            pl.BlockSpec((1, OUT), lambda i: (0, 0)),
        ],
        # Unpadded (TB, 5) output blocks: masked 5-lane stores are far cheaper
        # than writing 128 padded lanes to HBM and slicing them back afterwards.
        out_specs=pl.BlockSpec((TB, OUT), lambda i: (i, 0)),
        compiler_params=pltpu.CompilerParams(
            dimension_semantics=("parallel",)),
    )(x_in, w, b_row)

    return out[:B] if B_pad != B else out


class NetPallas:
    """Pallas mirror of the PyTorch Net: forward(x) = nn.Linear(5, 5)(x)."""

    def __init__(self, key, in_features=5, out_features=5):
        self.in_features = in_features
        self.out_features = out_features

        # torch.nn.Linear default init: U(-1/sqrt(in), 1/sqrt(in)) for W and b.
        kw, kb = jax.random.split(key)
        bound = 1.0 / (in_features ** 0.5)
        # Stored as (in, out) so the kernel computes x @ W directly
        # (equivalent to torch's x @ W_torch.T + b).
        self.w = jax.random.uniform(
            kw, (in_features, out_features), jnp.float32, -bound, bound)
        self.b = jax.random.uniform(
            kb, (out_features,), jnp.float32, -bound, bound)
        self.b_row = self.b[None, :]   # (1, out) for sublane broadcast in-kernel

    def __call__(self, x):
        # Accept 1D (features,) like the torch script's torch.ones(5), or 2D (B, F).
        squeeze = (x.ndim == 1)
        x_2d = x[None, :] if squeeze else x
        y = linear_pallas(x_2d, self.w, self.b_row)
        return y[0] if squeeze else y


if __name__ == "__main__":
    key = jax.random.PRNGKey(0)
    net = NetPallas(key)

    # Matches the torch script: x = torch.ones(5)
    x = jnp.ones((5,), dtype=jnp.float32)
    y = jax.block_until_ready(net(x))
    y_ref = x @ net.w + net.b
    assert y.shape == (5,)
    assert jnp.allclose(y, y_ref, atol=1e-5)

    # Single-block batched path (B multiple of 8, fits one tile: grid=(1,)).
    xb = jax.random.normal(jax.random.PRNGKey(1), (640, 5), jnp.float32)
    yb = jax.block_until_ready(net(xb))
    assert yb.shape == (640, 5)
    assert jnp.allclose(yb, xb @ net.w + net.b[None, :], atol=1e-5)

    # Multi-step tiled path (exercises the grid + batch-row padding).
    xc = jax.random.normal(jax.random.PRNGKey(2), (2500, 5), jnp.float32)
    yc = jax.block_until_ready(net(xc))
    assert yc.shape == (2500, 5)
    assert jnp.allclose(yc, xc @ net.w + net.b[None, :], atol=1e-5)

    print("KERNEL_OK")
</pallas_src>

<mosaic_0001>
module attributes {stable_mosaic.version = 11 : i64} {
  func.func @_linear_kernel(%arg0: i32, %arg1: memref<8x5xf32, #tpu.memory_space<vmem>>, %arg2: memref<5x5xf32, #tpu.memory_space<vmem>>, %arg3: memref<1x5xf32, #tpu.memory_space<vmem>>, %arg4: memref<8x5xf32, #tpu.memory_space<vmem>>) attributes {dimension_semantics = [#tpu.dimension_semantics<parallel>], iteration_bounds = array<i64: 1>, scalar_prefetch = 0 : i64, scratch_operands = 0 : i64, tpu.core_type = #tpu.core_type<tc>, window_params = [{transform_indices = @transform_0, window_bounds = array<i64: 8, 5>}, {pipeline_mode = #tpu.pipeline_mode<synchronous>, transform_indices = @transform_1, window_bounds = array<i64: 5, 5>}, {pipeline_mode = #tpu.pipeline_mode<synchronous>, transform_indices = @transform_2, window_bounds = array<i64: 1, 5>}, {transform_indices = @transform_3, window_bounds = array<i64: 8, 5>}]} {
    %c0 = arith.constant 0 : index
    %c0_0 = arith.constant 0 : index
    %0 = vector.load %arg1[%c0, %c0_0] : memref<8x5xf32, #tpu.memory_space<vmem>>, vector<8x5xf32>
    %c0_1 = arith.constant 0 : index
    %c0_2 = arith.constant 0 : index
    %1 = vector.load %arg2[%c0_1, %c0_2] : memref<5x5xf32, #tpu.memory_space<vmem>>, vector<5x5xf32>
    %c0_3 = arith.constant 0 : index
    %c0_4 = arith.constant 0 : index
    %2 = vector.load %arg3[%c0_3, %c0_4] : memref<1x5xf32, #tpu.memory_space<vmem>>, vector<1x5xf32>
    %3 = vector.extract_strided_slice %0 {offsets = [0, 0], sizes = [8, 1], strides = [1, 1]} : vector<8x5xf32> to vector<8x1xf32>
    %4 = vector.extract_strided_slice %1 {offsets = [0, 0], sizes = [1, 5], strides = [1, 1]} : vector<5x5xf32> to vector<1x5xf32>
    %5 = vector.broadcast %3 : vector<8x1xf32> to vector<8x5xf32>
    %6 = vector.broadcast %4 : vector<1x5xf32> to vector<8x5xf32>
    %7 = arith.mulf %5, %6 : vector<8x5xf32>
    %8 = vector.extract_strided_slice %0 {offsets = [0, 1], sizes = [8, 1], strides = [1, 1]} : vector<8x5xf32> to vector<8x1xf32>
    %9 = vector.extract_strided_slice %1 {offsets = [1, 0], sizes = [1, 5], strides = [1, 1]} : vector<5x5xf32> to vector<1x5xf32>
    %10 = vector.broadcast %8 : vector<8x1xf32> to vector<8x5xf32>
    %11 = vector.broadcast %9 : vector<1x5xf32> to vector<8x5xf32>
    %12 = arith.mulf %10, %11 : vector<8x5xf32>
    %13 = arith.addf %7, %12 : vector<8x5xf32>
    %14 = vector.extract_strided_slice %0 {offsets = [0, 2], sizes = [8, 1], strides = [1, 1]} : vector<8x5xf32> to vector<8x1xf32>
    %15 = vector.extract_strided_slice %1 {offsets = [2, 0], sizes = [1, 5], strides = [1, 1]} : vector<5x5xf32> to vector<1x5xf32>
    %16 = vector.broadcast %14 : vector<8x1xf32> to vector<8x5xf32>
    %17 = vector.broadcast %15 : vector<1x5xf32> to vector<8x5xf32>
    %18 = arith.mulf %16, %17 : vector<8x5xf32>
    %19 = arith.addf %13, %18 : vector<8x5xf32>
    %20 = vector.extract_strided_slice %0 {offsets = [0, 3], sizes = [8, 1], strides = [1, 1]} : vector<8x5xf32> to vector<8x1xf32>
    %21 = vector.extract_strided_slice %1 {offsets = [3, 0], sizes = [1, 5], strides = [1, 1]} : vector<5x5xf32> to vector<1x5xf32>
    %22 = vector.broadcast %20 : vector<8x1xf32> to vector<8x5xf32>
    %23 = vector.broadcast %21 : vector<1x5xf32> to vector<8x5xf32>
    %24 = arith.mulf %22, %23 : vector<8x5xf32>
    %25 = arith.addf %19, %24 : vector<8x5xf32>
    %26 = vector.extract_strided_slice %0 {offsets = [0, 4], sizes = [8, 1], strides = [1, 1]} : vector<8x5xf32> to vector<8x1xf32>
    %27 = vector.extract_strided_slice %1 {offsets = [4, 0], sizes = [1, 5], strides = [1, 1]} : vector<5x5xf32> to vector<1x5xf32>
    %28 = vector.broadcast %26 : vector<8x1xf32> to vector<8x5xf32>
    %29 = vector.broadcast %27 : vector<1x5xf32> to vector<8x5xf32>
    %30 = arith.mulf %28, %29 : vector<8x5xf32>
    %31 = arith.addf %25, %30 : vector<8x5xf32>
    %32 = vector.broadcast %2 : vector<1x5xf32> to vector<8x5xf32>
    %33 = arith.addf %31, %32 : vector<8x5xf32>
    %c0_5 = arith.constant 0 : index
    %c0_6 = arith.constant 0 : index
    %34 = vector.load %arg4[%c0_5, %c0_6] : memref<8x5xf32, #tpu.memory_space<vmem>>, vector<8x5xf32>
    tpu.vector_store %arg4[%c0_5, %c0_6], %33 {strides = array<i32>} : memref<8x5xf32, #tpu.memory_space<vmem>>, vector<8x5xf32>,
    return
  }
  func.func @transform_0(%arg0: i32) -> (i32, i32) {
    %c0_i32 = arith.constant 0 : i32
    %c0_i32_0 = arith.constant 0 : i32
    return %arg0, %c0_i32 : i32, i32
  }
  func.func @transform_1(%arg0: i32) -> (i32, i32) {
    %c0_i32 = arith.constant 0 : i32
    %c0_i32_0 = arith.constant 0 : i32
    %c0_i32_1 = arith.constant 0 : i32
    return %c0_i32, %c0_i32_0 : i32, i32
  }
  func.func @transform_2(%arg0: i32) -> (i32, i32) {
    %c0_i32 = arith.constant 0 : i32
    %c0_i32_0 = arith.constant 0 : i32
    %c0_i32_1 = arith.constant 0 : i32
    return %c0_i32, %c0_i32_0 : i32, i32
  }
  func.func @transform_3(%arg0: i32) -> (i32, i32) {
    %c0_i32 = arith.constant 0 : i32
    %c0_i32_0 = arith.constant 0 : i32
    return %arg0, %c0_i32 : i32, i32
  }
}

</mosaic_0001>

<llo_original>
// kernel: linear_pallas.1
$region0: #{linear_pallas.1}
  #allocation0 [shape = 'u32[]', space=smem, size = 0x4, offset = 0x4, fixed_abs, tag = 'smem constant byte address 0x4 - core index']
  #allocation1 [shape = 'u32[144,128]{1,0:T(1,128)}', space=vmem, size = 0x12000, scoped, tag = 'internal scratch']
  %s0 = inlined_call_operand.vmem [shape: f32[8,5], index: 0, kind: input, shape index: {}]
  %s1 = inlined_call_operand.vmem [shape: f32[5,5], index: 1, kind: input, shape index: {}]
  %s2 = inlined_call_operand.vmem [shape: f32[1,5], index: 2, kind: input, shape index: {}]
  %s3 = inlined_call_operand.vmem [shape: f32[8,5], index: 3, kind: output, shape index: {}]
  %s4 = sld [smem:[#allocation0]]
  $region22: #{linear_pallas.1} parent=0
    _
  %s6 = ssub.s32 1, %s4
  %s7 = scalar_select 0, %s6, %s4
  // Predicated region
  $region2: #{linear_pallas.1} parent=0 // pred_check
    _
  $region3: #{linear_pallas.1} parent=0 // pred_check_branch
    %9 = sbr.rel (0) target = $region5
  $region4: #{linear_pallas.1} parent=0 // pred_region
    _
  $region5: #{linear_pallas.1} parent=0 // pred_fallthru
    _
  // Predicated region
  $region6: #{linear_pallas.1} parent=0 // pred_check
    _
  $region7: #{linear_pallas.1} parent=0 // pred_check_branch
    %11 = sbr.rel (0) target = $region9
  $region8: #{linear_pallas.1} parent=0 // pred_region
    _
  $region9: #{linear_pallas.1} parent=0 // pred_fallthru
    _
  // Predicated region
  $region10: #{linear_pallas.1} parent=0 // pred_check
    _
  $region11: #{linear_pallas.1} parent=0 // pred_check_branch
    %13 = sbr.rel (0) target = $region13
  $region12: #{linear_pallas.1} parent=0 // pred_region
    _
  $region13: #{linear_pallas.1} parent=0 // pred_fallthru
    _
  %v14 = vld [vmem:[%s0] sm:$0xff]
  %v15 = vld [vmem:[%s1] sm:$0x1f]
  %v16 = vld [vmem:[%s2] sm:$0x1]
  %18 = vset.pattern.permute.xlu0 0
  %19 = vperm.xlu0 %18, %v14
  %v20 = vpop.permute.xlu0 %19
  %v22 = vlaneseq
  %v23 = vshrl.u32 %v22, 7
  %v24 = vsub.s32 0, %v23
  %v25 = vrot.slane %v15, %v24
  %v26 = vmul.f32 %v20, %v25
  %27 = vset.pattern.permute.xlu0 1
  %28 = vperm.xlu0 %27, %v14
  %v29 = vpop.permute.xlu0 %28
  %v31 = vlaneseq
  %v32 = vshrl.u32 %v31, 7
  %v33 = vsub.s32 1, %v32
  %v34 = vrot.slane %v15, %v33
  %v35 = vmul.f32 %v29, %v34
  %v36 = vadd.f32 %v26, %v35
  %37 = vset.pattern.permute.xlu0 2
  %38 = vperm.xlu0 %37, %v14
  %v39 = vpop.permute.xlu0 %38
  %v41 = vlaneseq
  %v42 = vshrl.u32 %v41, 7
  %v43 = vsub.s32 2, %v42
  %v44 = vrot.slane %v15, %v43
  %v45 = vmul.f32 %v39, %v44
  %v46 = vadd.f32 %v36, %v45
  %47 = vset.pattern.permute.xlu0 3
  %48 = vperm.xlu0 %47, %v14
  %v49 = vpop.permute.xlu0 %48
  %v51 = vlaneseq
  %v52 = vshrl.u32 %v51, 7
  %v53 = vsub.s32 3, %v52
  %v54 = vrot.slane %v15, %v53
  %v55 = vmul.f32 %v49, %v54
  %v56 = vadd.f32 %v46, %v55
  %57 = vset.pattern.permute.xlu0 4
  %58 = vperm.xlu0 %57, %v14
  %v59 = vpop.permute.xlu0 %58
  %v61 = vlaneseq
  %v62 = vshrl.u32 %v61, 7
  %v63 = vsub.s32 4, %v62
  %v64 = vrot.slane %v15, %v63
  %v65 = vmul.f32 %v59, %v64
  %v66 = vadd.f32 %v56, %v65
  %v68 = vlaneseq
  %v69 = vshrl.u32 %v68, 7
  %v70 = vsub.s32 0, %v69
  %v71 = vrot.slane %v16, %v70
  %v73 = vadd.f32 %v66, %v71
  %vm74 = vcmask 39936
  %75 = vst.msk [vmem:[%s3] sm:$0xff] %vm74, %v73
  // Predicated region
  $region14: #{linear_pallas.1} parent=0 // pred_check
    _
  $region15: #{linear_pallas.1} parent=0 // pred_check_branch
    %77 = sbr.rel (0) target = $region17
  $region16: #{linear_pallas.1} parent=0 // pred_region
    _
  $region17: #{linear_pallas.1} parent=0 // pred_fallthru
    _
  // Predicated region
  $region18: #{linear_pallas.1} parent=0 // pred_check
    _
  $region19: #{linear_pallas.1} parent=0 // pred_check_branch
    %79 = sbr.rel (0) target = $region21
  $region20: #{linear_pallas.1} parent=0 // pred_region
    _
  $region21: #{linear_pallas.1} parent=0 // pred_fallthru
    _

</llo_original>
